<compile_context>
chip_gen: v7x
topology: tpu7x:2x2x1
jax: 0.10.0
libtpu: 0.0.40
codegen_flags: <defaults>
</compile_context>

<pallas_src>
import functools

import jax
import jax.numpy as jnp
from jax import lax
from jax.experimental import pallas as pl
from jax.experimental.pallas import tpu as pltpu
import numpy as np


# ----------------------------- Pallas kernel ------------------------------ #

def bilstm_fc_kernel(ids_ref,      # [S*B, 1] int32, time-major token ids
                     mask_ref,     # [S*B, 1] f32, attention mask
                     emb_ref,      # [VOCAB, H] embedding table (BERT stand-in)
                     w_cat_ref,    # [H, 8R]  = [wih_f | wih_b]
                     b_cat_ref,    # [1, 8R]  = [b_f | b_b]  (b_ih + b_hh folded)
                     whh_f_ref,    # [R, 4R]  forward recurrent weights
                     w_fc_ref,     # [2R, C]  fc_rnn weight (pre-transposed)
                     b_fc_ref,     # [1, C]   fc_rnn bias
                     out_ref,      # [B, C]   logits
                     *, S, B, R):
    VOCAB, H = emb_ref.shape
    R4 = 4 * R
    SB = S * B

    # ---- fused encoder stand-in: one-hot gather on the MXU + mask -------- #
    ids = ids_ref[...]                                          # [S*B, 1]
    onehot = (lax.broadcasted_iota(jnp.int32, (SB, VOCAB), 1)
              == ids).astype(jnp.float32)                       # [S*B, VOCAB]
    emb = jnp.dot(onehot, emb_ref[...],
                  preferred_element_type=jnp.float32)           # [S*B, H]
    emb = emb * mask_ref[...]                                   # apply mask

    # ---- hoisted input projection for BOTH directions (+ both biases) ---- #
    # One big matmul outside the recurrence; per step only h @ whh_f remains
    # on the serial critical path.  Bias broadcast happens once, not S times.
    proj = (jnp.dot(emb, w_cat_ref[...],
                    preferred_element_type=jnp.float32)
            + b_cat_ref[...])                                   # [S*B, 8R]

    whh_f = whh_f_ref[...]

    def activate(gates):
        # 2 EUP passes over the full [B, 4R] vreg instead of 4 sub-vreg passes.
        sg = jax.nn.sigmoid(gates)
        th = jnp.tanh(gates)
        i = sg[:, 0 * R:1 * R]
        f = sg[:, 1 * R:2 * R]
        g = th[:, 2 * R:3 * R]
        o = sg[:, 3 * R:4 * R]
        return i, f, g, o

    # ---- forward recurrence, fully unrolled (S is static and small) ------ #
    h = jnp.zeros((B, R), jnp.float32)
    c = jnp.zeros((B, R), jnp.float32)
    for t in range(S):
        x_gates = proj[t * B:(t + 1) * B, 0:R4]                 # precomputed
        gates = x_gates + jnp.dot(h, whh_f,
                                  preferred_element_type=jnp.float32)
        i, f, g, o = activate(gates)
        c = f * c + i * g
        h = o * jnp.tanh(c)
    h_fwd_last = h

    # ---- backward direction: PyTorch's out[:, -1, R:] is the reverse ------ #
    # LSTM's first step from zero state, so the recurrent term h0 @ whh_b is
    # identically zero and whh_b is not needed at all.
    i, f, g, o = activate(proj[(S - 1) * B:S * B, R4:2 * R4])
    c_b = i * g                                                 # f * c0 == 0
    h_bwd_last = o * jnp.tanh(c_b)

    # ---- dropout (eval mode => identity) + fc_rnn on the last time step --- #
    feat = jnp.concatenate([h_fwd_last, h_bwd_last], axis=-1)   # [B, 2R]
    out_ref[...] = (jnp.dot(feat, w_fc_ref[...],
                            preferred_element_type=jnp.float32)
                    + b_fc_ref[...])


def bilstm_head(context_bs, mask_bs, emb_table, params, num_classes):
    """context_bs: [B, S] int32 token ids; mask_bs: [B, S] mask.

    Returns logits [B, num_classes].  Everything (embedding stand-in, BiLSTM
    recurrence, final Linear) runs inside one pallas_call.
    """
    B, S = context_bs.shape
    VOCAB, H = emb_table.shape
    R = params["whh_f"].shape[0]
    C = num_classes

    # Tiny id/mask tensors re-laid out time-major on the host side; the big
    # [S*B, H] activation never leaves VMEM.
    ids_sb = jnp.transpose(context_bs).reshape(S * B, 1)
    mask_sb = jnp.transpose(mask_bs).reshape(S * B, 1).astype(jnp.float32)

    kernel = functools.partial(bilstm_fc_kernel, S=S, B=B, R=R)
    vmem = lambda: pl.BlockSpec(memory_space=pltpu.MemorySpace.VMEM)

    return pl.pallas_call(
        kernel,
        out_shape=jax.ShapeDtypeStruct((B, C), jnp.float32),
        in_specs=[vmem() for _ in range(8)],
        out_specs=vmem(),
    )(ids_sb, mask_sb, emb_table,
      params["w_cat"], params["b_cat"], params["whh_f"],
      params["w_fc"], params["b_fc"])


# --------------------------- pure-JAX reference ---------------------------- #

def _cell_ref(x_t, h, c, w_ih, w_hh, b, R):
    gates = x_t @ w_ih + h @ w_hh + b
    i = jax.nn.sigmoid(gates[:, 0 * R:1 * R])
    f = jax.nn.sigmoid(gates[:, 1 * R:2 * R])
    g = jnp.tanh(gates[:, 2 * R:3 * R])
    o = jax.nn.sigmoid(gates[:, 3 * R:4 * R])
    c_new = f * c + i * g
    return o * jnp.tanh(c_new), c_new


def reference(x_emb_bsh, params, num_classes):
    """Full BiLSTM (all time steps) -> take out[:, -1, :] -> Linear."""
    B, S, H = x_emb_bsh.shape
    R = params["whh_f"].shape[0]
    h = c = jnp.zeros((B, R), jnp.float32)
    outs_f = []
    for t in range(S):
        h, c = _cell_ref(x_emb_bsh[:, t], h, c,
                         params["wih_f"], params["whh_f"], params["b_f"], R)
        outs_f.append(h)
    h = c = jnp.zeros((B, R), jnp.float32)
    outs_b = [None] * S
    for t in reversed(range(S)):
        h, c = _cell_ref(x_emb_bsh[:, t], h, c,
                         params["wih_b"], params["whh_b"], params["b_b"], R)
        outs_b[t] = h
    last = jnp.concatenate([outs_f[-1], outs_b[-1]], axis=-1)   # out[:, -1, :]
    return last @ params["w_fc"] + params["b_fc"]


# --------------------------------- main ------------------------------------ #

if __name__ == "__main__":
    # small config consistent with the module
    B, S = 2, 8              # batch, sequence length
    H = 32                   # config.hidden_size (BERT hidden)
    R = 32                   # config.rnn_hidden
    C = 4                    # config.num_classes
    VOCAB = 50

    key = jax.random.PRNGKey(0)
    keys = jax.random.split(key, 12)
    scale = 1.0 / np.sqrt(R)
    uni = lambda k, shape: jax.random.uniform(
        k, shape, jnp.float32, minval=-scale, maxval=scale)

    # reference parameters (PyTorch stores [4R, H]; we keep the transpose)
    ref_params = {
        "wih_f": uni(keys[0], (H, 4 * R)),
        "whh_f": uni(keys[1], (R, 4 * R)),
        "b_f":   uni(keys[2], (1, 4 * R)),   # b_ih + b_hh folded together
        "wih_b": uni(keys[3], (H, 4 * R)),
        "whh_b": uni(keys[4], (R, 4 * R)),   # reference only: h0 @ whh_b == 0
        "b_b":   uni(keys[5], (1, 4 * R)),
        "w_fc":  uni(keys[6], (2 * R, C)),
        "b_fc":  uni(keys[7], (1, C)),
    }
    # kernel parameters: both input projections concatenated, whh_b dropped
    kernel_params = {
        "w_cat": jnp.concatenate([ref_params["wih_f"], ref_params["wih_b"]], axis=1),
        "b_cat": jnp.concatenate([ref_params["b_f"], ref_params["b_b"]], axis=1),
        "whh_f": ref_params["whh_f"],
        "w_fc":  ref_params["w_fc"],
        "b_fc":  ref_params["b_fc"],
    }
    emb_table = jax.random.normal(keys[8], (VOCAB, H), jnp.float32) * 0.1

    # x = (context token ids, segment ids, attention mask)  -- as in forward()
    context = jax.random.randint(keys[9], (B, S), 0, VOCAB, dtype=jnp.int32)
    seg_ids = jnp.zeros((B, S), jnp.int32)          # unused (x[1])
    mask = jnp.ones((B, S), jnp.float32)            # x[2]
    x = (context, seg_ids, mask)

    bilstm_forward = jax.jit(bilstm_head, static_argnums=(4,))
    logits = bilstm_forward(x[0], x[2], emb_table, kernel_params, C)
    logits = jax.block_until_ready(logits)

    # reference path: explicit embedding lookup + full BiLSTM over all steps
    encoder_out = emb_table[x[0]] * x[2][..., None]          # [B, S, H]
    ref = reference(encoder_out, ref_params, C)
    np.testing.assert_allclose(np.asarray(logits), np.asarray(ref),
                               rtol=1e-4, atol=1e-4)

    print("KERNEL_OK")
</pallas_src>

<mosaic_0001>
module attributes {stable_mosaic.version = 11 : i64} {
  func.func @bilstm_fc_kernel(%arg0: memref<16x1xi32, #tpu.memory_space<vmem>>, %arg1: memref<16x1xf32, #tpu.memory_space<vmem>>, %arg2: memref<50x32xf32, #tpu.memory_space<vmem>>, %arg3: memref<32x256xf32, #tpu.memory_space<vmem>>, %arg4: memref<1x256xf32, #tpu.memory_space<vmem>>, %arg5: memref<32x128xf32, #tpu.memory_space<vmem>>, %arg6: memref<64x4xf32, #tpu.memory_space<vmem>>, %arg7: memref<1x4xf32, #tpu.memory_space<vmem>>, %arg8: memref<2x4xf32, #tpu.memory_space<vmem>>) attributes {dimension_semantics = [], scalar_prefetch = 0 : i64, scratch_operands = 0 : i64, tpu.core_type = #tpu.core_type<tc>} {
    %c0 = arith.constant 0 : index
    %c0_0 = arith.constant 0 : index
    %0 = vector.load %arg0[%c0, %c0_0] : memref<16x1xi32, #tpu.memory_space<vmem>>, vector<16x1xi32>
    %1 = tpu.iota {dimensions = array<i32: 1>} : vector<16x50xi32>
    %2 = vector.broadcast %0 : vector<16x1xi32> to vector<16x50xi32>
    %3 = arith.cmpi eq, %1, %2 : vector<16x50xi32>
    %4 = arith.extui %3 : vector<16x50xi1> to vector<16x50xi32>
    %5 = arith.sitofp %4 : vector<16x50xi32> to vector<16x50xf32>
    %c0_1 = arith.constant 0 : index
    %c0_2 = arith.constant 0 : index
    %6 = vector.load %arg2[%c0_1, %c0_2] : memref<50x32xf32, #tpu.memory_space<vmem>>, vector<50x32xf32>
    %cst = arith.constant dense<0.000000e+00> : vector<16x32xf32>
    %7 = tpu.matmul %5, %6, %cst {dimension_numbers = #tpu.dot_dimension_numbers<[1], [0], [0], [1], [0, 0, 1, 1], [], []>} : vector<16x50xf32>, vector<50x32xf32>, vector<16x32xf32> -> vector<16x32xf32>
    %c0_3 = arith.constant 0 : index
    %c0_4 = arith.constant 0 : index
    %8 = vector.load %arg1[%c0_3, %c0_4] : memref<16x1xf32, #tpu.memory_space<vmem>>, vector<16x1xf32>
    %9 = vector.broadcast %8 : vector<16x1xf32> to vector<16x32xf32>
    %10 = arith.mulf %7, %9 : vector<16x32xf32>
    %c0_5 = arith.constant 0 : index
    %c0_6 = arith.constant 0 : index
    %11 = vector.load %arg3[%c0_5, %c0_6] : memref<32x256xf32, #tpu.memory_space<vmem>>, vector<32x256xf32>
    %cst_7 = arith.constant dense<0.000000e+00> : vector<16x256xf32>
    %12 = tpu.matmul %10, %11, %cst_7 {dimension_numbers = #tpu.dot_dimension_numbers<[1], [0], [0], [1], [0, 0, 1, 1], [], []>} : vector<16x32xf32>, vector<32x256xf32>, vector<16x256xf32> -> vector<16x256xf32>
    %c0_8 = arith.constant 0 : index
    %c0_9 = arith.constant 0 : index
    %13 = vector.load %arg4[%c0_8, %c0_9] : memref<1x256xf32, #tpu.memory_space<vmem>>, vector<1x256xf32>
    %14 = vector.broadcast %13 : vector<1x256xf32> to vector<16x256xf32>
    %15 = arith.addf %12, %14 : vector<16x256xf32>
    %c0_10 = arith.constant 0 : index
    %c0_11 = arith.constant 0 : index
    %16 = vector.load %arg5[%c0_10, %c0_11] : memref<32x128xf32, #tpu.memory_space<vmem>>, vector<32x128xf32>
    %cst_12 = arith.constant 0.000000e+00 : f32
    %17 = vector.broadcast %cst_12 : f32 to vector<2x32xf32>
    %cst_13 = arith.constant 0.000000e+00 : f32
    %18 = vector.broadcast %cst_13 : f32 to vector<2x32xf32>
    %19 = vector.extract_strided_slice %15 {offsets = [0, 0], sizes = [2, 128], strides = [1, 1]} : vector<16x256xf32> to vector<2x128xf32>
    %cst_14 = arith.constant dense<0.000000e+00> : vector<2x128xf32>
    %20 = tpu.matmul %17, %16, %cst_14 {dimension_numbers = #tpu.dot_dimension_numbers<[1], [0], [0], [1], [0, 0, 1, 1], [], []>} : vector<2x32xf32>, vector<32x128xf32>, vector<2x128xf32> -> vector<2x128xf32>
    %21 = arith.addf %19, %20 : vector<2x128xf32>
    %22 = arith.negf %21 : vector<2x128xf32>
    %23 = math.exp %22 : vector<2x128xf32>
    %cst_15 = arith.constant 1.000000e+00 : f32
    %24 = vector.broadcast %cst_15 : f32 to vector<2x128xf32>
    %25 = arith.addf %24, %23 : vector<2x128xf32>
    %26 = arith.divf %24, %25 : vector<2x128xf32>
    %27 = math.tanh %21 : vector<2x128xf32>
    %28 = vector.extract_strided_slice %26 {offsets = [0, 0], sizes = [2, 32], strides = [1, 1]} : vector<2x128xf32> to vector<2x32xf32>
    %29 = vector.extract_strided_slice %26 {offsets = [0, 32], sizes = [2, 32], strides = [1, 1]} : vector<2x128xf32> to vector<2x32xf32>
    %30 = vector.extract_strided_slice %27 {offsets = [0, 64], sizes = [2, 32], strides = [1, 1]} : vector<2x128xf32> to vector<2x32xf32>
    %31 = vector.extract_strided_slice %26 {offsets = [0, 96], sizes = [2, 32], strides = [1, 1]} : vector<2x128xf32> to vector<2x32xf32>
    %32 = arith.mulf %29, %18 : vector<2x32xf32>
    %33 = arith.mulf %28, %30 : vector<2x32xf32>
    %34 = arith.addf %32, %33 : vector<2x32xf32>
    %35 = math.tanh %34 : vector<2x32xf32>
    %36 = arith.mulf %31, %35 : vector<2x32xf32>
    %37 = vector.extract_strided_slice %15 {offsets = [2, 0], sizes = [2, 128], strides = [1, 1]} : vector<16x256xf32> to vector<2x128xf32>
    %cst_16 = arith.constant dense<0.000000e+00> : vector<2x128xf32>
    %38 = tpu.matmul %36, %16, %cst_16 {dimension_numbers = #tpu.dot_dimension_numbers<[1], [0], [0], [1], [0, 0, 1, 1], [], []>} : vector<2x32xf32>, vector<32x128xf32>, vector<2x128xf32> -> vector<2x128xf32>
    %39 = arith.addf %37, %38 : vector<2x128xf32>
    %40 = arith.negf %39 : vector<2x128xf32>
    %41 = math.exp %40 : vector<2x128xf32>
    %cst_17 = arith.constant 1.000000e+00 : f32
    %42 = vector.broadcast %cst_17 : f32 to vector<2x128xf32>
    %43 = arith.addf %42, %41 : vector<2x128xf32>
    %44 = arith.divf %42, %43 : vector<2x128xf32>
    %45 = math.tanh %39 : vector<2x128xf32>
    %46 = vector.extract_strided_slice %44 {offsets = [0, 0], sizes = [2, 32], strides = [1, 1]} : vector<2x128xf32> to vector<2x32xf32>
    %47 = vector.extract_strided_slice %44 {offsets = [0, 32], sizes = [2, 32], strides = [1, 1]} : vector<2x128xf32> to vector<2x32xf32>
    %48 = vector.extract_strided_slice %45 {offsets = [0, 64], sizes = [2, 32], strides = [1, 1]} : vector<2x128xf32> to vector<2x32xf32>
    %49 = vector.extract_strided_slice %44 {offsets = [0, 96], sizes = [2, 32], strides = [1, 1]} : vector<2x128xf32> to vector<2x32xf32>
    %50 = arith.mulf %47, %34 : vector<2x32xf32>
    %51 = arith.mulf %46, %48 : vector<2x32xf32>
    %52 = arith.addf %50, %51 : vector<2x32xf32>
    %53 = math.tanh %52 : vector<2x32xf32>
    %54 = arith.mulf %49, %53 : vector<2x32xf32>
    %55 = vector.extract_strided_slice %15 {offsets = [4, 0], sizes = [2, 128], strides = [1, 1]} : vector<16x256xf32> to vector<2x128xf32>
    %cst_18 = arith.constant dense<0.000000e+00> : vector<2x128xf32>
    %56 = tpu.matmul %54, %16, %cst_18 {dimension_numbers = #tpu.dot_dimension_numbers<[1], [0], [0], [1], [0, 0, 1, 1], [], []>} : vector<2x32xf32>, vector<32x128xf32>, vector<2x128xf32> -> vector<2x128xf32>
    %57 = arith.addf %55, %56 : vector<2x128xf32>
    %58 = arith.negf %57 : vector<2x128xf32>
    %59 = math.exp %58 : vector<2x128xf32>
    %cst_19 = arith.constant 1.000000e+00 : f32
    %60 = vector.broadcast %cst_19 : f32 to vector<2x128xf32>
    %61 = arith.addf %60, %59 : vector<2x128xf32>
    %62 = arith.divf %60, %61 : vector<2x128xf32>
    %63 = math.tanh %57 : vector<2x128xf32>
    %64 = vector.extract_strided_slice %62 {offsets = [0, 0], sizes = [2, 32], strides = [1, 1]} : vector<2x128xf32> to vector<2x32xf32>
    %65 = vector.extract_strided_slice %62 {offsets = [0, 32], sizes = [2, 32], strides = [1, 1]} : vector<2x128xf32> to vector<2x32xf32>
    %66 = vector.extract_strided_slice %63 {offsets = [0, 64], sizes = [2, 32], strides = [1, 1]} : vector<2x128xf32> to vector<2x32xf32>
    %67 = vector.extract_strided_slice %62 {offsets = [0, 96], sizes = [2, 32], strides = [1, 1]} : vector<2x128xf32> to vector<2x32xf32>
    %68 = arith.mulf %65, %52 : vector<2x32xf32>
    %69 = arith.mulf %64, %66 : vector<2x32xf32>
    %70 = arith.addf %68, %69 : vector<2x32xf32>
    %71 = math.tanh %70 : vector<2x32xf32>
    %72 = arith.mulf %67, %71 : vector<2x32xf32>
    %73 = vector.extract_strided_slice %15 {offsets = [6, 0], sizes = [2, 128], strides = [1, 1]} : vector<16x256xf32> to vector<2x128xf32>
    %cst_20 = arith.constant dense<0.000000e+00> : vector<2x128xf32>
    %74 = tpu.matmul %72, %16, %cst_20 {dimension_numbers = #tpu.dot_dimension_numbers<[1], [0], [0], [1], [0, 0, 1, 1], [], []>} : vector<2x32xf32>, vector<32x128xf32>, vector<2x128xf32> -> vector<2x128xf32>
    %75 = arith.addf %73, %74 : vector<2x128xf32>
    %76 = arith.negf %75 : vector<2x128xf32>
    %77 = math.exp %76 : vector<2x128xf32>
    %cst_21 = arith.constant 1.000000e+00 : f32
    %78 = vector.broadcast %cst_21 : f32 to vector<2x128xf32>
    %79 = arith.addf %78, %77 : vector<2x128xf32>
    %80 = arith.divf %78, %79 : vector<2x128xf32>
    %81 = math.tanh %75 : vector<2x128xf32>
    %82 = vector.extract_strided_slice %80 {offsets = [0, 0], sizes = [2, 32], strides = [1, 1]} : vector<2x128xf32> to vector<2x32xf32>
    %83 = vector.extract_strided_slice %80 {offsets = [0, 32], sizes = [2, 32], strides = [1, 1]} : vector<2x128xf32> to vector<2x32xf32>
    %84 = vector.extract_strided_slice %81 {offsets = [0, 64], sizes = [2, 32], strides = [1, 1]} : vector<2x128xf32> to vector<2x32xf32>
    %85 = vector.extract_strided_slice %80 {offsets = [0, 96], sizes = [2, 32], strides = [1, 1]} : vector<2x128xf32> to vector<2x32xf32>
    %86 = arith.mulf %83, %70 : vector<2x32xf32>
    %87 = arith.mulf %82, %84 : vector<2x32xf32>
    %88 = arith.addf %86, %87 : vector<2x32xf32>
    %89 = math.tanh %88 : vector<2x32xf32>
    %90 = arith.mulf %85, %89 : vector<2x32xf32>
    %91 = vector.extract_strided_slice %15 {offsets = [8, 0], sizes = [2, 128], strides = [1, 1]} : vector<16x256xf32> to vector<2x128xf32>
    %cst_22 = arith.constant dense<0.000000e+00> : vector<2x128xf32>
    %92 = tpu.matmul %90, %16, %cst_22 {dimension_numbers = #tpu.dot_dimension_numbers<[1], [0], [0], [1], [0, 0, 1, 1], [], []>} : vector<2x32xf32>, vector<32x128xf32>, vector<2x128xf32> -> vector<2x128xf32>
    %93 = arith.addf %91, %92 : vector<2x128xf32>
    %94 = arith.negf %93 : vector<2x128xf32>
    %95 = math.exp %94 : vector<2x128xf32>
    %cst_23 = arith.constant 1.000000e+00 : f32
    %96 = vector.broadcast %cst_23 : f32 to vector<2x128xf32>
    %97 = arith.addf %96, %95 : vector<2x128xf32>
    %98 = arith.divf %96, %97 : vector<2x128xf32>
    %99 = math.tanh %93 : vector<2x128xf32>
    %100 = vector.extract_strided_slice %98 {offsets = [0, 0], sizes = [2, 32], strides = [1, 1]} : vector<2x128xf32> to vector<2x32xf32>
    %101 = vector.extract_strided_slice %98 {offsets = [0, 32], sizes = [2, 32], strides = [1, 1]} : vector<2x128xf32> to vector<2x32xf32>
    %102 = vector.extract_strided_slice %99 {offsets = [0, 64], sizes = [2, 32], strides = [1, 1]} : vector<2x128xf32> to vector<2x32xf32>
    %103 = vector.extract_strided_slice %98 {offsets = [0, 96], sizes = [2, 32], strides = [1, 1]} : vector<2x128xf32> to vector<2x32xf32>
    %104 = arith.mulf %101, %88 : vector<2x32xf32>
    %105 = arith.mulf %100, %102 : vector<2x32xf32>
    %106 = arith.addf %104, %105 : vector<2x32xf32>
    %107 = math.tanh %106 : vector<2x32xf32>
    %108 = arith.mulf %103, %107 : vector<2x32xf32>
    %109 = vector.extract_strided_slice %15 {offsets = [10, 0], sizes = [2, 128], strides = [1, 1]} : vector<16x256xf32> to vector<2x128xf32>
    %cst_24 = arith.constant dense<0.000000e+00> : vector<2x128xf32>
    %110 = tpu.matmul %108, %16, %cst_24 {dimension_numbers = #tpu.dot_dimension_numbers<[1], [0], [0], [1], [0, 0, 1, 1], [], []>} : vector<2x32xf32>, vector<32x128xf32>, vector<2x128xf32> -> vector<2x128xf32>
    %111 = arith.addf %109, %110 : vector<2x128xf32>
    %112 = arith.negf %111 : vector<2x128xf32>
    %113 = math.exp %112 : vector<2x128xf32>
    %cst_25 = arith.constant 1.000000e+00 : f32
    %114 = vector.broadcast %cst_25 : f32 to vector<2x128xf32>
    %115 = arith.addf %114, %113 : vector<2x128xf32>
    %116 = arith.divf %114, %115 : vector<2x128xf32>
    %117 = math.tanh %111 : vector<2x128xf32>
    %118 = vector.extract_strided_slice %116 {offsets = [0, 0], sizes = [2, 32], strides = [1, 1]} : vector<2x128xf32> to vector<2x32xf32>
    %119 = vector.extract_strided_slice %116 {offsets = [0, 32], sizes = [2, 32], strides = [1, 1]} : vector<2x128xf32> to vector<2x32xf32>
    %120 = vector.extract_strided_slice %117 {offsets = [0, 64], sizes = [2, 32], strides = [1, 1]} : vector<2x128xf32> to vector<2x32xf32>
    %121 = vector.extract_strided_slice %116 {offsets = [0, 96], sizes = [2, 32], strides = [1, 1]} : vector<2x128xf32> to vector<2x32xf32>
    %122 = arith.mulf %119, %106 : vector<2x32xf32>
    %123 = arith.mulf %118, %120 : vector<2x32xf32>
    %124 = arith.addf %122, %123 : vector<2x32xf32>
    %125 = math.tanh %124 : vector<2x32xf32>
    %126 = arith.mulf %121, %125 : vector<2x32xf32>
    %127 = vector.extract_strided_slice %15 {offsets = [12, 0], sizes = [2, 128], strides = [1, 1]} : vector<16x256xf32> to vector<2x128xf32>
    %cst_26 = arith.constant dense<0.000000e+00> : vector<2x128xf32>
    %128 = tpu.matmul %126, %16, %cst_26 {dimension_numbers = #tpu.dot_dimension_numbers<[1], [0], [0], [1], [0, 0, 1, 1], [], []>} : vector<2x32xf32>, vector<32x128xf32>, vector<2x128xf32> -> vector<2x128xf32>
    %129 = arith.addf %127, %128 : vector<2x128xf32>
    %130 = arith.negf %129 : vector<2x128xf32>
    %131 = math.exp %130 : vector<2x128xf32>
    %cst_27 = arith.constant 1.000000e+00 : f32
    %132 = vector.broadcast %cst_27 : f32 to vector<2x128xf32>
    %133 = arith.addf %132, %131 : vector<2x128xf32>
    %134 = arith.divf %132, %133 : vector<2x128xf32>
    %135 = math.tanh %129 : vector<2x128xf32>
    %136 = vector.extract_strided_slice %134 {offsets = [0, 0], sizes = [2, 32], strides = [1, 1]} : vector<2x128xf32> to vector<2x32xf32>
    %137 = vector.extract_strided_slice %134 {offsets = [0, 32], sizes = [2, 32], strides = [1, 1]} : vector<2x128xf32> to vector<2x32xf32>
    %138 = vector.extract_strided_slice %135 {offsets = [0, 64], sizes = [2, 32], strides = [1, 1]} : vector<2x128xf32> to vector<2x32xf32>
    %139 = vector.extract_strided_slice %134 {offsets = [0, 96], sizes = [2, 32], strides = [1, 1]} : vector<2x128xf32> to vector<2x32xf32>
    %140 = arith.mulf %137, %124 : vector<2x32xf32>
    %141 = arith.mulf %136, %138 : vector<2x32xf32>
    %142 = arith.addf %140, %141 : vector<2x32xf32>
    %143 = math.tanh %142 : vector<2x32xf32>
    %144 = arith.mulf %139, %143 : vector<2x32xf32>
    %145 = vector.extract_strided_slice %15 {offsets = [14, 0], sizes = [2, 128], strides = [1, 1]} : vector<16x256xf32> to vector<2x128xf32>
    %cst_28 = arith.constant dense<0.000000e+00> : vector<2x128xf32>
    %146 = tpu.matmul %144, %16, %cst_28 {dimension_numbers = #tpu.dot_dimension_numbers<[1], [0], [0], [1], [0, 0, 1, 1], [], []>} : vector<2x32xf32>, vector<32x128xf32>, vector<2x128xf32> -> vector<2x128xf32>
    %147 = arith.addf %145, %146 : vector<2x128xf32>
    %148 = arith.negf %147 : vector<2x128xf32>
    %149 = math.exp %148 : vector<2x128xf32>
    %cst_29 = arith.constant 1.000000e+00 : f32
    %150 = vector.broadcast %cst_29 : f32 to vector<2x128xf32>
    %151 = arith.addf %150, %149 : vector<2x128xf32>
    %152 = arith.divf %150, %151 : vector<2x128xf32>
    %153 = math.tanh %147 : vector<2x128xf32>
    %154 = vector.extract_strided_slice %152 {offsets = [0, 0], sizes = [2, 32], strides = [1, 1]} : vector<2x128xf32> to vector<2x32xf32>
    %155 = vector.extract_strided_slice %152 {offsets = [0, 32], sizes = [2, 32], strides = [1, 1]} : vector<2x128xf32> to vector<2x32xf32>
    %156 = vector.extract_strided_slice %153 {offsets = [0, 64], sizes = [2, 32], strides = [1, 1]} : vector<2x128xf32> to vector<2x32xf32>
    %157 = vector.extract_strided_slice %152 {offsets = [0, 96], sizes = [2, 32], strides = [1, 1]} : vector<2x128xf32> to vector<2x32xf32>
    %158 = arith.mulf %155, %142 : vector<2x32xf32>
    %159 = arith.mulf %154, %156 : vector<2x32xf32>
    %160 = arith.addf %158, %159 : vector<2x32xf32>
    %161 = math.tanh %160 : vector<2x32xf32>
    %162 = arith.mulf %157, %161 : vector<2x32xf32>
    %163 = vector.extract_strided_slice %15 {offsets = [14, 128], sizes = [2, 128], strides = [1, 1]} : vector<16x256xf32> to vector<2x128xf32>
    %164 = arith.negf %163 : vector<2x128xf32>
    %165 = math.exp %164 : vector<2x128xf32>
    %cst_30 = arith.constant 1.000000e+00 : f32
    %166 = vector.broadcast %cst_30 : f32 to vector<2x128xf32>
    %167 = arith.addf %166, %165 : vector<2x128xf32>
    %168 = arith.divf %166, %167 : vector<2x128xf32>
    %169 = math.tanh %163 : vector<2x128xf32>
    %170 = vector.extract_strided_slice %168 {offsets = [0, 0], sizes = [2, 32], strides = [1, 1]} : vector<2x128xf32> to vector<2x32xf32>
    %171 = vector.extract_strided_slice %169 {offsets = [0, 64], sizes = [2, 32], strides = [1, 1]} : vector<2x128xf32> to vector<2x32xf32>
    %172 = vector.extract_strided_slice %168 {offsets = [0, 96], sizes = [2, 32], strides = [1, 1]} : vector<2x128xf32> to vector<2x32xf32>
    %173 = arith.mulf %170, %171 : vector<2x32xf32>
    %174 = math.tanh %173 : vector<2x32xf32>
    %175 = arith.mulf %172, %174 : vector<2x32xf32>
    %176 = tpu.concatenate %162, %175 in 1 : vector<2x32xf32>, vector<2x32xf32> -> vector<2x64xf32>
    %c0_31 = arith.constant 0 : index
    %c0_32 = arith.constant 0 : index
    %177 = vector.load %arg6[%c0_31, %c0_32] : memref<64x4xf32, #tpu.memory_space<vmem>>, vector<64x4xf32>
    %cst_33 = arith.constant dense<0.000000e+00> : vector<2x4xf32>
    %178 = tpu.matmul %176, %177, %cst_33 {dimension_numbers = #tpu.dot_dimension_numbers<[1], [0], [0], [1], [0, 0, 1, 1], [], []>} : vector<2x64xf32>, vector<64x4xf32>, vector<2x4xf32> -> vector<2x4xf32>
    %c0_34 = arith.constant 0 : index
    %c0_35 = arith.constant 0 : index
    %179 = vector.load %arg7[%c0_34, %c0_35] : memref<1x4xf32, #tpu.memory_space<vmem>>, vector<1x4xf32>
    %180 = vector.broadcast %179 : vector<1x4xf32> to vector<2x4xf32>
    %181 = arith.addf %178, %180 : vector<2x4xf32>
    %c0_36 = arith.constant 0 : index
    %c0_37 = arith.constant 0 : index
    %182 = vector.load %arg8[%c0_36, %c0_37] : memref<2x4xf32, #tpu.memory_space<vmem>>, vector<2x4xf32>
    tpu.vector_store %arg8[%c0_36, %c0_37], %181 {strides = array<i32>} : memref<2x4xf32, #tpu.memory_space<vmem>>, vector<2x4xf32>,
    return
  }
}

</mosaic_0001>

<llo_original>
// kernel: bilstm_head.1
$region0: #{bilstm_head.1}
  #allocation0 [shape = 'u32[]', space=smem, size = 0x4, offset = 0x4, fixed_abs, tag = 'smem constant byte address 0x4 - core index']
  #allocation1 [shape = 'u32[144,128]{1,0:T(1,128)}', space=vmem, size = 0x12000, scoped, tag = 'internal scratch']
  %s0 = inlined_call_operand.vmem [shape: s32[16,1], index: 0, kind: input, shape index: {}]
  %s1 = inlined_call_operand.vmem [shape: f32[16,1], index: 1, kind: input, shape index: {}]
  %s2 = inlined_call_operand.vmem [shape: f32[50,32], index: 2, kind: input, shape index: {}]
  %s3 = inlined_call_operand.vmem [shape: f32[32,256], index: 3, kind: input, shape index: {}]
  %s4 = inlined_call_operand.vmem [shape: f32[1,256], index: 4, kind: input, shape index: {}]
  %s5 = inlined_call_operand.vmem [shape: f32[32,128], index: 5, kind: input, shape index: {}]
  %s6 = inlined_call_operand.vmem [shape: f32[64,4], index: 6, kind: input, shape index: {}]
  %s7 = inlined_call_operand.vmem [shape: f32[1,4], index: 7, kind: input, shape index: {}]
  %s8 = inlined_call_operand.hbm [shape: f32[2,4], index: 8, kind: output, shape index: {}]
  %s9 = sld [smem:[#allocation0]]
  $region42: #{bilstm_head.1} parent=0
    _
  %s11 = ssub.s32 1, %s9
  %s12 = scalar_select 0, %s11, %s9
  $region1: #{bilstm_head.1} parent=0
    #allocation2 [shape = 'u8[1024]{0}', space=vmem, size = 0x400, scoped, tag = 'output window, operand 0, single buffered']
    #allocation3 [shape = 's32[1]{0}', space=sflag, size = 0x4, scoped, tag = 'scoped memory for bilstm_head.1']
    %13 = vsyncpa [#allocation3], 0
    // Predicated region
    $region2: #{bilstm_head.1} parent=1 // pred_check
      _
    $region3: #{bilstm_head.1} parent=1 // pred_check_branch
      %15 = sbr.rel (0) target = $region5
    $region4: #{bilstm_head.1} parent=1 // pred_region
      _
    $region5: #{bilstm_head.1} parent=1 // pred_fallthru
      _
    // Predicated region
    $region6: #{bilstm_head.1} parent=1 // pred_check
      _
    $region7: #{bilstm_head.1} parent=1 // pred_check_branch
      %17 = sbr.rel (0) target = $region9
    $region8: #{bilstm_head.1} parent=1 // pred_region
      _
    $region9: #{bilstm_head.1} parent=1 // pred_fallthru
      _
    // Predicated region
    $region10: #{bilstm_head.1} parent=1 // pred_check
      _
    $region11: #{bilstm_head.1} parent=1 // pred_check_branch
      %19 = sbr.rel (0) target = $region13
    $region12: #{bilstm_head.1} parent=1 // pred_region
      _
    $region13: #{bilstm_head.1} parent=1 // pred_fallthru
      _
    // Predicated region
    $region14: #{bilstm_head.1} parent=1 // pred_check
      _
    $region15: #{bilstm_head.1} parent=1 // pred_check_branch
      %21 = sbr.rel (0) target = $region17
    $region16: #{bilstm_head.1} parent=1 // pred_region
      _
    $region17: #{bilstm_head.1} parent=1 // pred_fallthru
      _
    // Predicated region
    $region18: #{bilstm_head.1} parent=1 // pred_check
      _
    $region19: #{bilstm_head.1} parent=1 // pred_check_branch
      %23 = sbr.rel (0) target = $region21
    $region20: #{bilstm_head.1} parent=1 // pred_region
      _
    $region21: #{bilstm_head.1} parent=1 // pred_fallthru
      _
    // Predicated region
    $region22: #{bilstm_head.1} parent=1 // pred_check
      _
    $region23: #{bilstm_head.1} parent=1 // pred_check_branch
      %25 = sbr.rel (0) target = $region25
    $region24: #{bilstm_head.1} parent=1 // pred_region
      _
    $region25: #{bilstm_head.1} parent=1 // pred_fallthru
      _
    // Predicated region
    $region26: #{bilstm_head.1} parent=1 // pred_check
      _
    $region27: #{bilstm_head.1} parent=1 // pred_check_branch
      %27 = sbr.rel (0) target = $region29
    $region28: #{bilstm_head.1} parent=1 // pred_region
      _
    $region29: #{bilstm_head.1} parent=1 // pred_fallthru
      _
    // Predicated region
    $region30: #{bilstm_head.1} parent=1 // pred_check
      _
    $region31: #{bilstm_head.1} parent=1 // pred_check_branch
      %29 = sbr.rel (0) target = $region33
    $region32: #{bilstm_head.1} parent=1 // pred_region
      _
    $region33: #{bilstm_head.1} parent=1 // pred_fallthru
      _
    %v30 = vld [vmem:[%s0] sm:$0xff]
    %v31 = vld [vmem:[%s0 + $0x8] sm:$0xff]
    %v32 = vlaneseq
    %v33 = vand.u32 %v32, 127
    %34 = vset.pattern.permute.xlu0 0
    %35 = vperm.xlu0 %34, %v30
    %v36 = vpop.permute.xlu0 %35
    %37 = vset.pattern.permute.xlu0 0
    %38 = vperm.xlu0 %37, %v31
    %v39 = vpop.permute.xlu0 %38
    %vm40 = vcmp.eq.s32.totalorder %v33, %v36
    %vm41 = vcmp.eq.s32.totalorder %v33, %v39
    %v42 = vsel %vm40, 1, 0
    %v43 = vsel %vm41, 1, 0
    %v44 = vcvt.s32.f32 %v42
    %v45 = vcvt.s32.f32 %v43
    %v46 = vld [vmem:[%s2] sm:$0xff]
    %v47 = vld [vmem:[%s2 + $0x8] sm:$0xff]
    %v48 = vld [vmem:[%s2 + $0x10] sm:$0xff]
    %v49 = vld [vmem:[%s2 + $0x18] sm:$0xff]
    %v50 = vld [vmem:[%s2 + $0x20] sm:$0xff]
    %v51 = vld [vmem:[%s2 + $0x28] sm:$0xff]
    %v52 = vld [vmem:[%s2 + $0x30] sm:$0x3]
    %vm53 = vcmask 408576
    %v55 = vsel %vm53, %v44, 0
    %v58 = vsel %vm53, %v45, 0
    %vm60 = vcmask 1041408
    %v62 = vsel %vm60, %v52, 0
    %64 = vmatprep.subr.mxu0 0.0
    %65 = vmatpush1.msra.mxu0 %v46
    %66 = vmatprep.subr.mxu0 0.0
    %67 = vmatpush1.msra.mxu0 %v47
    %68 = vmatprep.subr.mxu0 0.0
    %69 = vmatpush1.msra.mxu0 %v48
    %70 = vmatprep.subr.mxu0 0.0
    %71 = vmatpush1.msra.mxu0 %v49
    %72 = vmatprep.subr.mxu0 0.0
    %73 = vmatpush1.msra.mxu0 %v50
    %74 = vmatprep.subr.mxu0 0.0
    %75 = vmatpush1.msra.mxu0 %v51
    %76 = vmatprep.subr.mxu0 0.0
    %77 = vmatpush1.msra.mxu0 %v62
    %78 = vmatprep.subr.mxu0 0.0
    %79 = vmatpush1.msra.mxu0 0.0
    %80 = vmatprep.subr.mxu0 0.0
    %81 = vmatpush1.msra.mxu0 0.0
    %82 = vmatprep.subr.mxu0 0.0
    %83 = vmatpush1.msra.mxu0 0.0
    %84 = vmatprep.subr.mxu0 0.0
    %85 = vmatpush1.msra.mxu0 0.0
    %86 = vmatprep.subr.mxu0 0.0
    %87 = vmatpush1.msra.mxu0 0.0
    %88 = vmatprep.subr.mxu0 0.0
    %89 = vmatpush1.msra.mxu0 0.0
    %90 = vmatprep.subr.mxu0 0.0
    %91 = vmatpush1.msra.mxu0 0.0
    %92 = vmatprep.subr.mxu0 0.0
    %93 = vmatpush1.msra.mxu0 0.0
    %94 = vmatprep.subr.mxu0 0.0
    %95 = vmatpush1.msra.mxu0 0.0
    %96 = vmatprep.subr.mxu0 0.0
    %97 = vmatpush1.msra.mxu0 0.0
    %98 = vmatprep.subr.mxu0 0.0
    %99 = vmatpush1.msra.mxu0 0.0
    %100 = vmatprep.subr.mxu0 0.0
    %101 = vmatpush1.msra.mxu0 0.0
    %102 = vmatprep.subr.mxu0 0.0
    %103 = vmatpush1.msra.mxu0 0.0
    %104 = vmatprep.subr.mxu0 0.0
    %105 = vmatpush1.msra.mxu0 0.0
    %106 = vmatprep.subr.mxu0 0.0
    %107 = vmatpush1.msra.mxu0 0.0
    %108 = vmatprep.subr.mxu0 0.0
    %109 = vmatpush1.msra.mxu0 0.0
    %110 = vmatprep.subr.mxu0 0.0
    %111 = vmatpush1.msra.mxu0 0.0
    %112 = vmatprep.subr.mxu0 0.0
    %113 = vmatpush1.msra.mxu0 0.0
    %114 = vmatprep.subr.mxu0 0.0
    %115 = vmatpush1.msra.mxu0 0.0
    %116 = vmatprep.subr.mxu0 0.0
    %117 = vmatpush1.msra.mxu0 0.0
    %118 = vmatprep.subr.mxu0 0.0
    %119 = vmatpush1.msra.mxu0 0.0
    %120 = vmatprep.subr.mxu0 0.0
    %121 = vmatpush1.msra.mxu0 0.0
    %122 = vmatprep.subr.mxu0 0.0
    %123 = vmatpush1.msra.mxu0 0.0
    %124 = vmatprep.subr.mxu0 0.0
    %125 = vmatpush1.msra.mxu0 0.0
    %126 = vmatprep.subr.mxu0 0.0
    %127 = vmatpush1.msra.mxu0 0.0
    %128 = vmatprep.mubr.f32.mxu0 0.0
    %129 = vmatmul.mubr.f32.gmra.mrb[0].mxu0 %v55
    %v130 = vpop.f32.mrb[0].mxu0
    %v131 = vadd.f32 0.0, %v130
    %v132 = vpop.f32.mrb[0].mxu0
    %133 = vmatprep.mubr.f32.mxu0 0.0
    %134 = vmatmul.mubr.f32.gmra.mrb[0].mxu0 %v58
    %v135 = vpop.f32.mrb[0].mxu0
    %v136 = vadd.f32 0.0, %v135
    %v137 = vpop.f32.mrb[0].mxu0
    %138 = vdwg.mxu0
    %v139 = vld [vmem:[%s1] sm:$0xff]
    %v140 = vld [vmem:[%s1 + $0x8] sm:$0xff]
    %142 = vset.pattern.permute.xlu0 0
    %143 = vperm.xlu0 %142, %v139
    %v144 = vpop.permute.xlu0 %143
    %147 = vset.pattern.permute.xlu0 0
    %148 = vperm.xlu0 %147, %v140
    %v149 = vpop.permute.xlu0 %148
    %v151 = vmul.f32 %v131, %v144
    %v152 = vmul.f32 %v136, %v149
    %v153 = vld [vmem:[%s3] sm:$0xff]
    %v154 = vld [vmem:[%s3 + $0x8] sm:$0xff]
    %v155 = vld [vmem:[%s3 + $0x10] sm:$0xff]
    %v156 = vld [vmem:[%s3 + $0x18] sm:$0xff]
    %v157 = vld [vmem:[%s3 + $0x20] sm:$0xff]
    %v158 = vld [vmem:[%s3 + $0x28] sm:$0xff]
    %v159 = vld [vmem:[%s3 + $0x30] sm:$0xff]
    %v160 = vld [vmem:[%s3 + $0x38] sm:$0xff]
    %v161 = vld [vmem:[%s4] sm:$0x3]
    %v163 = vlaneseq
    %v164 = vshrl.u32 %v163, 7
    %v165 = vsub.s32 0, %v164
    %v166 = vrot.slane %v161, %v165
    %v167 = vlaneseq
    %v168 = vshrl.u32 %v167, 7
    %v169 = vsub.s32 1, %v168
    %v170 = vrot.slane %v161, %v169
    %vm173 = vcmask 261120
    %v175 = vsel %vm173, %v151, 0
    %v178 = vsel %vm173, %v152, 0
    %180 = vmatprep.subr.mxu0 %v154
    %181 = vmatpush1.msra.mxu0 %v153
    %182 = vmatprep.subr.mxu0 %v156
    %183 = vmatpush1.msra.mxu0 %v155
    %184 = vmatprep.subr.mxu0 %v158
    %185 = vmatpush1.msra.mxu0 %v157
    %186 = vmatprep.subr.mxu0 %v160
    %187 = vmatpush1.msra.mxu0 %v159
    %188 = vmatprep.subr.mxu0 0.0
    %189 = vmatpush1.msra.mxu0 0.0
    %190 = vmatprep.subr.mxu0 0.0
    %191 = vmatpush1.msra.mxu0 0.0
    %192 = vmatprep.subr.mxu0 0.0
    %193 = vmatpush1.msra.mxu0 0.0
    %194 = vmatprep.subr.mxu0 0.0
    %195 = vmatpush1.msra.mxu0 0.0
    %196 = vmatprep.subr.mxu0 0.0
    %197 = vmatpush1.msra.mxu0 0.0
    %198 = vmatprep.subr.mxu0 0.0
    %199 = vmatpush1.msra.mxu0 0.0
    %200 = vmatprep.subr.mxu0 0.0
    %201 = vmatpush1.msra.mxu0 0.0
    %202 = vmatprep.subr.mxu0 0.0
    %203 = vmatpush1.msra.mxu0 0.0
    %204 = vmatprep.subr.mxu0 0.0
    %205 = vmatpush1.msra.mxu0 0.0
    %206 = vmatprep.subr.mxu0 0.0
    %207 = vmatpush1.msra.mxu0 0.0
    %208 = vmatprep.subr.mxu0 0.0
    %209 = vmatpush1.msra.mxu0 0.0
    %210 = vmatprep.subr.mxu0 0.0
    %211 = vmatpush1.msra.mxu0 0.0
    %212 = vmatprep.subr.mxu0 0.0
    %213 = vmatpush1.msra.mxu0 0.0
    %214 = vmatprep.subr.mxu0 0.0
    %215 = vmatpush1.msra.mxu0 0.0
    %216 = vmatprep.subr.mxu0 0.0
    %217 = vmatpush1.msra.mxu0 0.0
    %218 = vmatprep.subr.mxu0 0.0
    %219 = vmatpush1.msra.mxu0 0.0
    %220 = vmatprep.subr.mxu0 0.0
    %221 = vmatpush1.msra.mxu0 0.0
    %222 = vmatprep.subr.mxu0 0.0
    %223 = vmatpush1.msra.mxu0 0.0
    %224 = vmatprep.subr.mxu0 0.0
    %225 = vmatpush1.msra.mxu0 0.0
    %226 = vmatprep.subr.mxu0 0.0
    %227 = vmatpush1.msra.mxu0 0.0
    %228 = vmatprep.subr.mxu0 0.0
    %229 = vmatpush1.msra.mxu0 0.0
    %230 = vmatprep.subr.mxu0 0.0
    %231 = vmatpush1.msra.mxu0 0.0
    %232 = vmatprep.subr.mxu0 0.0
    %233 = vmatpush1.msra.mxu0 0.0
    %234 = vmatprep.subr.mxu0 0.0
    %235 = vmatpush1.msra.mxu0 0.0
    %236 = vmatprep.subr.mxu0 0.0
    %237 = vmatpush1.msra.mxu0 0.0
    %238 = vmatprep.subr.mxu0 0.0
    %239 = vmatpush1.msra.mxu0 0.0
    %240 = vmatprep.subr.mxu0 0.0
    %241 = vmatpush1.msra.mxu0 0.0
    %242 = vmatprep.subr.mxu0 0.0
    %243 = vmatpush1.msra.mxu0 0.0
    %244 = vmatprep.mubr.f32.mxu0 0.0
    %245 = vmatmul.mubr.f32.gmra.mrb[0].mxu0 %v175
    %v246 = vpop.f32.mrb[0].mxu0
    %v247 = vadd.f32 %v166, %v246
    %v248 = vpop.f32.mrb[0].mxu0
    %249 = vmatprep.mubr.f32.mxu0 0.0
    %250 = vmatmul.mubr.f32.gmra.mrb[0].mxu0 %v178
    %v251 = vpop.f32.mrb[0].mxu0
    %v252 = vadd.f32 %v166, %v251
    %v253 = vpop.f32.mrb[0].mxu0
    %v254 = vadd.f32 %v170, %v253
    %255 = vdwg.mxu0
    %v256 = vld [vmem:[%s5] sm:$0xff]
    %v257 = vld [vmem:[%s5 + $0x8] sm:$0xff]
    %v258 = vld [vmem:[%s5 + $0x10] sm:$0xff]
    %v259 = vld [vmem:[%s5 + $0x18] sm:$0xff]
    %v261 = vsel %vm173, 0.0, 0
    %263 = vmatprep.subr.mxu0 0.0
    %264 = vmatpush1.msra.mxu0 %v256
    %265 = vmatprep.subr.mxu0 0.0
    %266 = vmatpush1.msra.mxu0 %v257
    %267 = vmatprep.subr.mxu0 0.0
    %268 = vmatpush1.msra.mxu0 %v258
    %269 = vmatprep.subr.mxu0 0.0
    %270 = vmatpush1.msra.mxu0 %v259
    %271 = vmatprep.subr.mxu0 0.0
    %272 = vmatpush1.msra.mxu0 0.0
    %273 = vmatprep.subr.mxu0 0.0
    %274 = vmatpush1.msra.mxu0 0.0
    %275 = vmatprep.subr.mxu0 0.0
    %276 = vmatpush1.msra.mxu0 0.0
    %277 = vmatprep.subr.mxu0 0.0
    %278 = vmatpush1.msra.mxu0 0.0
    %279 = vmatprep.subr.mxu0 0.0
    %280 = vmatpush1.msra.mxu0 0.0
    %281 = vmatprep.subr.mxu0 0.0
    %282 = vmatpush1.msra.mxu0 0.0
    %283 = vmatprep.subr.mxu0 0.0
    %284 = vmatpush1.msra.mxu0 0.0
    %285 = vmatprep.subr.mxu0 0.0
    %286 = vmatpush1.msra.mxu0 0.0
    %287 = vmatprep.subr.mxu0 0.0
    %288 = vmatpush1.msra.mxu0 0.0
    %289 = vmatprep.subr.mxu0 0.0
    %290 = vmatpush1.msra.mxu0 0.0
    %291 = vmatprep.subr.mxu0 0.0
    %292 = vmatpush1.msra.mxu0 0.0
    %293 = vmatprep.subr.mxu0 0.0
    %294 = vmatpush1.msra.mxu0 0.0
    %295 = vmatprep.subr.mxu0 0.0
    %296 = vmatpush1.msra.mxu0 0.0
    %297 = vmatprep.subr.mxu0 0.0
    %298 = vmatpush1.msra.mxu0 0.0
    %299 = vmatprep.subr.mxu0 0.0
    %300 = vmatpush1.msra.mxu0 0.0
    %301 = vmatprep.subr.mxu0 0.0
    %302 = vmatpush1.msra.mxu0 0.0
    %303 = vmatprep.subr.mxu0 0.0
    %304 = vmatpush1.msra.mxu0 0.0
    %305 = vmatprep.subr.mxu0 0.0
    %306 = vmatpush1.msra.mxu0 0.0
    %307 = vmatprep.subr.mxu0 0.0
    %308 = vmatpush1.msra.mxu0 0.0
    %309 = vmatprep.subr.mxu0 0.0
    %310 = vmatpush1.msra.mxu0 0.0
    %311 = vmatprep.subr.mxu0 0.0
    %312 = vmatpush1.msra.mxu0 0.0
    %313 = vmatprep.subr.mxu0 0.0
    %314 = vmatpush1.msra.mxu0 0.0
    %315 = vmatprep.subr.mxu0 0.0
    %316 = vmatpush1.msra.mxu0 0.0
    %317 = vmatprep.subr.mxu0 0.0
    %318 = vmatpush1.msra.mxu0 0.0
    %319 = vmatprep.subr.mxu0 0.0
    %320 = vmatpush1.msra.mxu0 0.0
    %321 = vmatprep.subr.mxu0 0.0
    %322 = vmatpush1.msra.mxu0 0.0
    %323 = vmatprep.subr.mxu0 0.0
    %324 = vmatpush1.msra.mxu0 0.0
    %325 = vmatprep.subr.mxu0 0.0
    %326 = vmatpush1.msra.mxu0 0.0
    %327 = vmatprep.mubr.f32.mxu0 0.0
    %328 = vmatmul.mubr.f32.gmra.mrb[0].mxu0 %v261
    %v329 = vpop.f32.mrb[0].mxu0
    %v330 = vadd.f32 0.0, %v329
    %v331 = vpop.f32.mrb[0].mxu0
    %332 = vdwg.mxu0
    %v333 = vadd.f32 %v247, %v330
    %v334 = vxor.u32 %v333, 2147483648
    %v335 = vmul.f32 %v334, 1.442695
    %v336 = vpow.pop %v335
    %v337 = vadd.f32 %v336, 1.0
    %v338 = vrcp.pop %v337
    %v339 = vmul.f32 1.0, %v338
    %v340 = vtanh.pop %v333
    %v341 = vmul.f32 %v339, 0.0
    %343 = vrot.lane.b32.xlu0 %v340, 64
    %v344 = vpop.permute.xlu0 %343
    %v346 = vmul.f32 %v339, %v344
    %348 = vrot.lane.b32.xlu0 %v346, 32
    %v349 = vpop.permute.xlu0 %348
    %v351 = vadd.f32 %v341, %v349
    %v352 = vtanh.pop %v351
    %354 = vrot.lane.b32.xlu0 %v352, 64
    %v355 = vpop.permute.xlu0 %354
    %v357 = vmul.f32 %v339, %v355
    %359 = vrot.lane.b32.xlu0 %v357, 32
    %v360 = vpop.permute.xlu0 %359
    %v361 = vsel %vm173, %v360, 0
    %363 = vmatprep.subr.mxu0 0.0
    %364 = vmatpush1.msra.mxu0 %v256
    %365 = vmatprep.subr.mxu0 0.0
    %366 = vmatpush1.msra.mxu0 %v257
    %367 = vmatprep.subr.mxu0 0.0
    %368 = vmatpush1.msra.mxu0 %v258
    %369 = vmatprep.subr.mxu0 0.0
    %370 = vmatpush1.msra.mxu0 %v259
    %371 = vmatprep.subr.mxu0 0.0
    %372 = vmatpush1.msra.mxu0 0.0
    %373 = vmatprep.subr.mxu0 0.0
    %374 = vmatpush1.msra.mxu0 0.0
    %375 = vmatprep.subr.mxu0 0.0
    %376 = vmatpush1.msra.mxu0 0.0
    %377 = vmatprep.subr.mxu0 0.0
    %378 = vmatpush1.msra.mxu0 0.0
    %379 = vmatprep.subr.mxu0 0.0
    %380 = vmatpush1.msra.mxu0 0.0
    %381 = vmatprep.subr.mxu0 0.0
    %382 = vmatpush1.msra.mxu0 0.0
    %383 = vmatprep.subr.mxu0 0.0
    %384 = vmatpush1.msra.mxu0 0.0
    %385 = vmatprep.subr.mxu0 0.0
    %386 = vmatpush1.msra.mxu0 0.0
    %387 = vmatprep.subr.mxu0 0.0
    %388 = vmatpush1.msra.mxu0 0.0
    %389 = vmatprep.subr.mxu0 0.0
    %390 = vmatpush1.msra.mxu0 0.0
    %391 = vmatprep.subr.mxu0 0.0
    %392 = vmatpush1.msra.mxu0 0.0
    %393 = vmatprep.subr.mxu0 0.0
    %394 = vmatpush1.msra.mxu0 0.0
    %395 = vmatprep.subr.mxu0 0.0
    %396 = vmatpush1.msra.mxu0 0.0
    %397 = vmatprep.subr.mxu0 0.0
    %398 = vmatpush1.msra.mxu0 0.0
    %399 = vmatprep.subr.mxu0 0.0
    %400 = vmatpush1.msra.mxu0 0.0
    %401 = vmatprep.subr.mxu0 0.0
    %402 = vmatpush1.msra.mxu0 0.0
    %403 = vmatprep.subr.mxu0 0.0
    %404 = vmatpush1.msra.mxu0 0.0
    %405 = vmatprep.subr.mxu0 0.0
    %406 = vmatpush1.msra.mxu0 0.0
    %407 = vmatprep.subr.mxu0 0.0
    %408 = vmatpush1.msra.mxu0 0.0
    %409 = vmatprep.subr.mxu0 0.0
    %410 = vmatpush1.msra.mxu0 0.0
    %411 = vmatprep.subr.mxu0 0.0
    %412 = vmatpush1.msra.mxu0 0.0
    %413 = vmatprep.subr.mxu0 0.0
    %414 = vmatpush1.msra.mxu0 0.0
    %415 = vmatprep.subr.mxu0 0.0
    %416 = vmatpush1.msra.mxu0 0.0
    %417 = vmatprep.subr.mxu0 0.0
    %418 = vmatpush1.msra.mxu0 0.0
    %419 = vmatprep.subr.mxu0 0.0
    %420 = vmatpush1.msra.mxu0 0.0
    %421 = vmatprep.subr.mxu0 0.0
    %422 = vmatpush1.msra.mxu0 0.0
    %423 = vmatprep.subr.mxu0 0.0
    %424 = vmatpush1.msra.mxu0 0.0
    %425 = vmatprep.subr.mxu0 0.0
    %426 = vmatpush1.msra.mxu0 0.0
    %427 = vmatprep.mubr.f32.mxu0 0.0
    %428 = vmatmul.mubr.f32.gmra.mrb[0].mxu0 %v361
    %v429 = vpop.f32.mrb[0].mxu0
    %v430 = vadd.f32 0.0, %v429
    %v431 = vpop.f32.mrb[0].mxu0
    %432 = vdwg.mxu0
    %v434 = vrot.slane %v430, 6
    %v436 = vadd.f32 %v247, %v434
    %v437 = vxor.u32 %v436, 2147483648
    %v438 = vmul.f32 %v437, 1.442695
    %v439 = vpow.pop %v438
    %v440 = vadd.f32 %v439, 1.0
    %v441 = vrcp.pop %v440
    %v442 = vmul.f32 1.0, %v441
    %v443 = vtanh.pop %v436
    %v445 = vrot.slane %v351, 6
    %v447 = vmul.f32 %v442, %v445
    %449 = vrot.lane.b32.xlu0 %v443, 64
    %v450 = vpop.permute.xlu0 %449
    %v452 = vmul.f32 %v442, %v450
    %454 = vrot.lane.b32.xlu0 %v452, 32
    %v455 = vpop.permute.xlu0 %454
    %v457 = vadd.f32 %v447, %v455
    %v458 = vtanh.pop %v457
    %460 = vrot.lane.b32.xlu0 %v458, 64
    %v461 = vpop.permute.xlu0 %460
    %v463 = vmul.f32 %v442, %v461
    %v465 = vrot.slane %v463, 2
    %466 = vrot.lane.b32.xlu0 %v465, 32
    %v467 = vpop.permute.xlu0 %466
    %v468 = vsel %vm173, %v467, 0
    %470 = vmatprep.subr.mxu0 0.0
    %471 = vmatpush1.msra.mxu0 %v256
    %472 = vmatprep.subr.mxu0 0.0
    %473 = vmatpush1.msra.mxu0 %v257
    %474 = vmatprep.subr.mxu0 0.0
    %475 = vmatpush1.msra.mxu0 %v258
    %476 = vmatprep.subr.mxu0 0.0
    %477 = vmatpush1.msra.mxu0 %v259
    %478 = vmatprep.subr.mxu0 0.0
    %479 = vmatpush1.msra.mxu0 0.0
    %480 = vmatprep.subr.mxu0 0.0
    %481 = vmatpush1.msra.mxu0 0.0
    %482 = vmatprep.subr.mxu0 0.0
    %483 = vmatpush1.msra.mxu0 0.0
    %484 = vmatprep.subr.mxu0 0.0
    %485 = vmatpush1.msra.mxu0 0.0
    %486 = vmatprep.subr.mxu0 0.0
    %487 = vmatpush1.msra.mxu0 0.0
    %488 = vmatprep.subr.mxu0 0.0
    %489 = vmatpush1.msra.mxu0 0.0
    %490 = vmatprep.subr.mxu0 0.0
    %491 = vmatpush1.msra.mxu0 0.0
    %492 = vmatprep.subr.mxu0 0.0
    %493 = vmatpush1.msra.mxu0 0.0
    %494 = vmatprep.subr.mxu0 0.0
    %495 = vmatpush1.msra.mxu0 0.0
    %496 = vmatprep.subr.mxu0 0.0
    %497 = vmatpush1.msra.mxu0 0.0
    %498 = vmatprep.subr.mxu0 0.0
    %499 = vmatpush1.msra.mxu0 0.0
    %500 = vmatprep.subr.mxu0 0.0
    %501 = vmatpush1.msra.mxu0 0.0
    %502 = vmatprep.subr.mxu0 0.0
    %503 = vmatpush1.msra.mxu0 0.0
    %504 = vmatprep.subr.mxu0 0.0
    %505 = vmatpush1.msra.mxu0 0.0
    %506 = vmatprep.subr.mxu0 0.0
    %507 = vmatpush1.msra.mxu0 0.0
    %508 = vmatprep.subr.mxu0 0.0
    %509 = vmatpush1.msra.mxu0 0.0
    %510 = vmatprep.subr.mxu0 0.0
    %511 = vmatpush1.msra.mxu0 0.0
    %512 = vmatprep.subr.mxu0 0.0
    %513 = vmatpush1.msra.mxu0 0.0
    %514 = vmatprep.subr.mxu0 0.0
    %515 = vmatpush1.msra.mxu0 0.0
    %516 = vmatprep.subr.mxu0 0.0
    %517 = vmatpush1.msra.mxu0 0.0
    %518 = vmatprep.subr.mxu0 0.0
    %519 = vmatpush1.msra.mxu0 0.0
    %520 = vmatprep.subr.mxu0 0.0
    %521 = vmatpush1.msra.mxu0 0.0
    %522 = vmatprep.subr.mxu0 0.0
    %523 = vmatpush1.msra.mxu0 0.0
    %524 = vmatprep.subr.mxu0 0.0
    %525 = vmatpush1.msra.mxu0 0.0
    %526 = vmatprep.subr.mxu0 0.0
    %527 = vmatpush1.msra.mxu0 0.0
    %528 = vmatprep.subr.mxu0 0.0
    %529 = vmatpush1.msra.mxu0 0.0
    %530 = vmatprep.subr.mxu0 0.0
    %531 = vmatpush1.msra.mxu0 0.0
    %532 = vmatprep.subr.mxu0 0.0
    %533 = vmatpush1.msra.mxu0 0.0
    %534 = vmatprep.mubr.f32.mxu0 0.0
    %535 = vmatmul.mubr.f32.gmra.mrb[0].mxu0 %v468
    %v536 = vpop.f32.mrb[0].mxu0
    %v537 = vadd.f32 0.0, %v536
    %v538 = vpop.f32.mrb[0].mxu0
    %539 = vdwg.mxu0
    %v541 = vrot.slane %v537, 4
    %v543 = vadd.f32 %v247, %v541
    %v544 = vxor.u32 %v543, 2147483648
    %v545 = vmul.f32 %v544, 1.442695
    %v546 = vpow.pop %v545
    %v547 = vadd.f32 %v546, 1.0
    %v548 = vrcp.pop %v547
    %v549 = vmul.f32 1.0, %v548
    %v550 = vtanh.pop %v543
    %v552 = vrot.slane %v457, 6
    %v554 = vmul.f32 %v549, %v552
    %556 = vrot.lane.b32.xlu0 %v550, 64
    %v557 = vpop.permute.xlu0 %556
    %v559 = vmul.f32 %v549, %v557
    %561 = vrot.lane.b32.xlu0 %v559, 32
    %v562 = vpop.permute.xlu0 %561
    %v564 = vadd.f32 %v554, %v562
    %v565 = vtanh.pop %v564
    %567 = vrot.lane.b32.xlu0 %v565, 64
    %v568 = vpop.permute.xlu0 %567
    %v570 = vmul.f32 %v549, %v568
    %v572 = vrot.slane %v570, 4
    %573 = vrot.lane.b32.xlu0 %v572, 32
    %v574 = vpop.permute.xlu0 %573
    %v575 = vsel %vm173, %v574, 0
    %577 = vmatprep.subr.mxu0 0.0
    %578 = vmatpush1.msra.mxu0 %v256
    %579 = vmatprep.subr.mxu0 0.0
    %580 = vmatpush1.msra.mxu0 %v257
    %581 = vmatprep.subr.mxu0 0.0
    %582 = vmatpush1.msra.mxu0 %v258
    %583 = vmatprep.subr.mxu0 0.0
    %584 = vmatpush1.msra.mxu0 %v259
    %585 = vmatprep.subr.mxu0 0.0
    %586 = vmatpush1.msra.mxu0 0.0
    %587 = vmatprep.subr.mxu0 0.0
    %588 = vmatpush1.msra.mxu0 0.0
    %589 = vmatprep.subr.mxu0 0.0
    %590 = vmatpush1.msra.mxu0 0.0
    %591 = vmatprep.subr.mxu0 0.0
    %592 = vmatpush1.msra.mxu0 0.0
    %593 = vmatprep.subr.mxu0 0.0
    %594 = vmatpush1.msra.mxu0 0.0
    %595 = vmatprep.subr.mxu0 0.0
    %596 = vmatpush1.msra.mxu0 0.0
    %597 = vmatprep.subr.mxu0 0.0
    %598 = vmatpush1.msra.mxu0 0.0
    %599 = vmatprep.subr.mxu0 0.0
    %600 = vmatpush1.msra.mxu0 0.0
    %601 = vmatprep.subr.mxu0 0.0
    %602 = vmatpush1.msra.mxu0 0.0
    %603 = vmatprep.subr.mxu0 0.0
    %604 = vmatpush1.msra.mxu0 0.0
    %605 = vmatprep.subr.mxu0 0.0
    %606 = vmatpush1.msra.mxu0 0.0
    %607 = vmatprep.subr.mxu0 0.0
    %608 = vmatpush1.msra.mxu0 0.0
    %609 = vmatprep.subr.mxu0 0.0
    %610 = vmatpush1.msra.mxu0 0.0
    %611 = vmatprep.subr.mxu0 0.0
    %612 = vmatpush1.msra.mxu0 0.0
    %613 = vmatprep.subr.mxu0 0.0
    %614 = vmatpush1.msra.mxu0 0.0
    %615 = vmatprep.subr.mxu0 0.0
    %616 = vmatpush1.msra.mxu0 0.0
    %617 = vmatprep.subr.mxu0 0.0
    %618 = vmatpush1.msra.mxu0 0.0
    %619 = vmatprep.subr.mxu0 0.0
    %620 = vmatpush1.msra.mxu0 0.0
    %621 = vmatprep.subr.mxu0 0.0
    %622 = vmatpush1.msra.mxu0 0.0
    %623 = vmatprep.subr.mxu0 0.0
    %624 = vmatpush1.msra.mxu0 0.0
    %625 = vmatprep.subr.mxu0 0.0
    %626 = vmatpush1.msra.mxu0 0.0
    %627 = vmatprep.subr.mxu0 0.0
    %628 = vmatpush1.msra.mxu0 0.0
    %629 = vmatprep.subr.mxu0 0.0
    %630 = vmatpush1.msra.mxu0 0.0
    %631 = vmatprep.subr.mxu0 0.0
    %632 = vmatpush1.msra.mxu0 0.0
    %633 = vmatprep.subr.mxu0 0.0
    %634 = vmatpush1.msra.mxu0 0.0
    %635 = vmatprep.subr.mxu0 0.0
    %636 = vmatpush1.msra.mxu0 0.0
    %637 = vmatprep.subr.mxu0 0.0
    %638 = vmatpush1.msra.mxu0 0.0
    %639 = vmatprep.subr.mxu0 0.0
    %640 = vmatpush1.msra.mxu0 0.0
    %641 = vmatprep.mubr.f32.mxu0 0.0
    %642 = vmatmul.mubr.f32.gmra.mrb[0].mxu0 %v575
    %v643 = vpop.f32.mrb[0].mxu0
    %v644 = vadd.f32 0.0, %v643
    %v645 = vpop.f32.mrb[0].mxu0
    %646 = vdwg.mxu0
    %v648 = vrot.slane %v644, 2
    %v650 = vadd.f32 %v247, %v648
    %v651 = vxor.u32 %v650, 2147483648
    %v652 = vmul.f32 %v651, 1.442695
    %v653 = vpow.pop %v652
    %v654 = vadd.f32 %v653, 1.0
    %v655 = vrcp.pop %v654
    %v656 = vmul.f32 1.0, %v655
    %v657 = vtanh.pop %v650
    %v659 = vrot.slane %v564, 6
    %v661 = vmul.f32 %v656, %v659
    %663 = vrot.lane.b32.xlu0 %v657, 64
    %v664 = vpop.permute.xlu0 %663
    %v666 = vmul.f32 %v656, %v664
    %668 = vrot.lane.b32.xlu0 %v666, 32
    %v669 = vpop.permute.xlu0 %668
    %v671 = vadd.f32 %v661, %v669
    %v672 = vtanh.pop %v671
    %674 = vrot.lane.b32.xlu0 %v672, 64
    %v675 = vpop.permute.xlu0 %674
    %v677 = vmul.f32 %v656, %v675
    %v679 = vrot.slane %v677, 6
    %680 = vrot.lane.b32.xlu0 %v679, 32
    %v681 = vpop.permute.xlu0 %680
    %v682 = vsel %vm173, %v681, 0
    %684 = vmatprep.subr.mxu0 0.0
    %685 = vmatpush1.msra.mxu0 %v256
    %686 = vmatprep.subr.mxu0 0.0
    %687 = vmatpush1.msra.mxu0 %v257
    %688 = vmatprep.subr.mxu0 0.0
    %689 = vmatpush1.msra.mxu0 %v258
    %690 = vmatprep.subr.mxu0 0.0
    %691 = vmatpush1.msra.mxu0 %v259
    %692 = vmatprep.subr.mxu0 0.0
    %693 = vmatpush1.msra.mxu0 0.0
    %694 = vmatprep.subr.mxu0 0.0
    %695 = vmatpush1.msra.mxu0 0.0
    %696 = vmatprep.subr.mxu0 0.0
    %697 = vmatpush1.msra.mxu0 0.0
    %698 = vmatprep.subr.mxu0 0.0
    %699 = vmatpush1.msra.mxu0 0.0
    %700 = vmatprep.subr.mxu0 0.0
    %701 = vmatpush1.msra.mxu0 0.0
    %702 = vmatprep.subr.mxu0 0.0
    %703 = vmatpush1.msra.mxu0 0.0
    %704 = vmatprep.subr.mxu0 0.0
    %705 = vmatpush1.msra.mxu0 0.0
    %706 = vmatprep.subr.mxu0 0.0
    %707 = vmatpush1.msra.mxu0 0.0
    %708 = vmatprep.subr.mxu0 0.0
    %709 = vmatpush1.msra.mxu0 0.0
    %710 = vmatprep.subr.mxu0 0.0
    %711 = vmatpush1.msra.mxu0 0.0
    %712 = vmatprep.subr.mxu0 0.0
    %713 = vmatpush1.msra.mxu0 0.0
    %714 = vmatprep.subr.mxu0 0.0
    %715 = vmatpush1.msra.mxu0 0.0
    %716 = vmatprep.subr.mxu0 0.0
    %717 = vmatpush1.msra.mxu0 0.0
    %718 = vmatprep.subr.mxu0 0.0
    %719 = vmatpush1.msra.mxu0 0.0
    %720 = vmatprep.subr.mxu0 0.0
    %721 = vmatpush1.msra.mxu0 0.0
    %722 = vmatprep.subr.mxu0 0.0
    %723 = vmatpush1.msra.mxu0 0.0
    %724 = vmatprep.subr.mxu0 0.0
    %725 = vmatpush1.msra.mxu0 0.0
    %726 = vmatprep.subr.mxu0 0.0
    %727 = vmatpush1.msra.mxu0 0.0
    %728 = vmatprep.subr.mxu0 0.0
    %729 = vmatpush1.msra.mxu0 0.0
    %730 = vmatprep.subr.mxu0 0.0
    %731 = vmatpush1.msra.mxu0 0.0
    %732 = vmatprep.subr.mxu0 0.0
    %733 = vmatpush1.msra.mxu0 0.0
    %734 = vmatprep.subr.mxu0 0.0
    %735 = vmatpush1.msra.mxu0 0.0
    %736 = vmatprep.subr.mxu0 0.0
    %737 = vmatpush1.msra.mxu0 0.0
    %738 = vmatprep.subr.mxu0 0.0
    %739 = vmatpush1.msra.mxu0 0.0
    %740 = vmatprep.subr.mxu0 0.0
    %741 = vmatpush1.msra.mxu0 0.0
    %742 = vmatprep.subr.mxu0 0.0
    %743 = vmatpush1.msra.mxu0 0.0
    %744 = vmatprep.subr.mxu0 0.0
    %745 = vmatpush1.msra.mxu0 0.0
    %746 = vmatprep.subr.mxu0 0.0
    %747 = vmatpush1.msra.mxu0 0.0
    %748 = vmatprep.mubr.f32.mxu0 0.0
    %749 = vmatmul.mubr.f32.gmra.mrb[0].mxu0 %v682
    %v750 = vpop.f32.mrb[0].mxu0
    %v751 = vadd.f32 0.0, %v750
    %v752 = vpop.f32.mrb[0].mxu0
    %753 = vdwg.mxu0
    %v754 = vadd.f32 %v252, %v751
    %v755 = vxor.u32 %v754, 2147483648
    %v756 = vmul.f32 %v755, 1.442695
    %v757 = vpow.pop %v756
    %v758 = vadd.f32 %v757, 1.0
    %v759 = vrcp.pop %v758
    %v760 = vmul.f32 1.0, %v759
    %v761 = vtanh.pop %v754
    %v763 = vrot.slane %v671, 6
    %v765 = vmul.f32 %v760, %v763
    %767 = vrot.lane.b32.xlu0 %v761, 64
    %v768 = vpop.permute.xlu0 %767
    %v770 = vmul.f32 %v760, %v768
    %772 = vrot.lane.b32.xlu0 %v770, 32
    %v773 = vpop.permute.xlu0 %772
    %v775 = vadd.f32 %v765, %v773
    %v776 = vtanh.pop %v775
    %778 = vrot.lane.b32.xlu0 %v776, 64
    %v779 = vpop.permute.xlu0 %778
    %v781 = vmul.f32 %v760, %v779
    %783 = vrot.lane.b32.xlu0 %v781, 32
    %v784 = vpop.permute.xlu0 %783
    %v785 = vsel %vm173, %v784, 0
    %787 = vmatprep.subr.mxu0 0.0
    %788 = vmatpush1.msra.mxu0 %v256
    %789 = vmatprep.subr.mxu0 0.0
    %790 = vmatpush1.msra.mxu0 %v257
    %791 = vmatprep.subr.mxu0 0.0
    %792 = vmatpush1.msra.mxu0 %v258
    %793 = vmatprep.subr.mxu0 0.0
    %794 = vmatpush1.msra.mxu0 %v259
    %795 = vmatprep.subr.mxu0 0.0
    %796 = vmatpush1.msra.mxu0 0.0
    %797 = vmatprep.subr.mxu0 0.0
    %798 = vmatpush1.msra.mxu0 0.0
    %799 = vmatprep.subr.mxu0 0.0
    %800 = vmatpush1.msra.mxu0 0.0
    %801 = vmatprep.subr.mxu0 0.0
    %802 = vmatpush1.msra.mxu0 0.0
    %803 = vmatprep.subr.mxu0 0.0
    %804 = vmatpush1.msra.mxu0 0.0
    %805 = vmatprep.subr.mxu0 0.0
    %806 = vmatpush1.msra.mxu0 0.0
    %807 = vmatprep.subr.mxu0 0.0
    %808 = vmatpush1.msra.mxu0 0.0
    %809 = vmatprep.subr.mxu0 0.0
    %810 = vmatpush1.msra.mxu0 0.0
    %811 = vmatprep.subr.mxu0 0.0
    %812 = vmatpush1.msra.mxu0 0.0
    %813 = vmatprep.subr.mxu0 0.0
    %814 = vmatpush1.msra.mxu0 0.0
    %815 = vmatprep.subr.mxu0 0.0
    %816 = vmatpush1.msra.mxu0 0.0
    %817 = vmatprep.subr.mxu0 0.0
    %818 = vmatpush1.msra.mxu0 0.0
    %819 = vmatprep.subr.mxu0 0.0
    %820 = vmatpush1.msra.mxu0 0.0
    %821 = vmatprep.subr.mxu0 0.0
    %822 = vmatpush1.msra.mxu0 0.0
    %823 = vmatprep.subr.mxu0 0.0
    %824 = vmatpush1.msra.mxu0 0.0
    %825 = vmatprep.subr.mxu0 0.0
    %826 = vmatpush1.msra.mxu0 0.0
    %827 = vmatprep.subr.mxu0 0.0
    %828 = vmatpush1.msra.mxu0 0.0
    %829 = vmatprep.subr.mxu0 0.0
    %830 = vmatpush1.msra.mxu0 0.0
    %831 = vmatprep.subr.mxu0 0.0
    %832 = vmatpush1.msra.mxu0 0.0
    %833 = vmatprep.subr.mxu0 0.0
    %834 = vmatpush1.msra.mxu0 0.0
    %835 = vmatprep.subr.mxu0 0.0
    %836 = vmatpush1.msra.mxu0 0.0
    %837 = vmatprep.subr.mxu0 0.0
    %838 = vmatpush1.msra.mxu0 0.0
    %839 = vmatprep.subr.mxu0 0.0
    %840 = vmatpush1.msra.mxu0 0.0
    %841 = vmatprep.subr.mxu0 0.0
    %842 = vmatpush1.msra.mxu0 0.0
    %843 = vmatprep.subr.mxu0 0.0
    %844 = vmatpush1.msra.mxu0 0.0
    %845 = vmatprep.subr.mxu0 0.0
    %846 = vmatpush1.msra.mxu0 0.0
    %847 = vmatprep.subr.mxu0 0.0
    %848 = vmatpush1.msra.mxu0 0.0
    %849 = vmatprep.subr.mxu0 0.0
    %850 = vmatpush1.msra.mxu0 0.0
    %851 = vmatprep.mubr.f32.mxu0 0.0
    %852 = vmatmul.mubr.f32.gmra.mrb[0].mxu0 %v785
    %v853 = vpop.f32.mrb[0].mxu0
    %v854 = vadd.f32 0.0, %v853
    %v855 = vpop.f32.mrb[0].mxu0
    %856 = vdwg.mxu0
    %v858 = vrot.slane %v854, 6
    %v860 = vadd.f32 %v252, %v858
    %v861 = vxor.u32 %v860, 2147483648
    %v862 = vmul.f32 %v861, 1.442695
    %v863 = vpow.pop %v862
    %v864 = vadd.f32 %v863, 1.0
    %v865 = vrcp.pop %v864
    %v866 = vmul.f32 1.0, %v865
    %v867 = vtanh.pop %v860
    %v869 = vrot.slane %v775, 6
    %v871 = vmul.f32 %v866, %v869
    %873 = vrot.lane.b32.xlu0 %v867, 64
    %v874 = vpop.permute.xlu0 %873
    %v876 = vmul.f32 %v866, %v874
    %878 = vrot.lane.b32.xlu0 %v876, 32
    %v879 = vpop.permute.xlu0 %878
    %v881 = vadd.f32 %v871, %v879
    %v882 = vtanh.pop %v881
    %884 = vrot.lane.b32.xlu0 %v882, 64
    %v885 = vpop.permute.xlu0 %884
    %v887 = vmul.f32 %v866, %v885
    %v889 = vrot.slane %v887, 2
    %890 = vrot.lane.b32.xlu0 %v889, 32
    %v891 = vpop.permute.xlu0 %890
    %v892 = vsel %vm173, %v891, 0
    %894 = vmatprep.subr.mxu0 0.0
    %895 = vmatpush1.msra.mxu0 %v256
    %896 = vmatprep.subr.mxu0 0.0
    %897 = vmatpush1.msra.mxu0 %v257
    %898 = vmatprep.subr.mxu0 0.0
    %899 = vmatpush1.msra.mxu0 %v258
    %900 = vmatprep.subr.mxu0 0.0
    %901 = vmatpush1.msra.mxu0 %v259
    %902 = vmatprep.subr.mxu0 0.0
    %903 = vmatpush1.msra.mxu0 0.0
    %904 = vmatprep.subr.mxu0 0.0
    %905 = vmatpush1.msra.mxu0 0.0
    %906 = vmatprep.subr.mxu0 0.0
    %907 = vmatpush1.msra.mxu0 0.0
    %908 = vmatprep.subr.mxu0 0.0
    %909 = vmatpush1.msra.mxu0 0.0
    %910 = vmatprep.subr.mxu0 0.0
    %911 = vmatpush1.msra.mxu0 0.0
    %912 = vmatprep.subr.mxu0 0.0
    %913 = vmatpush1.msra.mxu0 0.0
    %914 = vmatprep.subr.mxu0 0.0
    %915 = vmatpush1.msra.mxu0 0.0
    %916 = vmatprep.subr.mxu0 0.0
    %917 = vmatpush1.msra.mxu0 0.0
    %918 = vmatprep.subr.mxu0 0.0
    %919 = vmatpush1.msra.mxu0 0.0
    %920 = vmatprep.subr.mxu0 0.0
    %921 = vmatpush1.msra.mxu0 0.0
    %922 = vmatprep.subr.mxu0 0.0
    %923 = vmatpush1.msra.mxu0 0.0
    %924 = vmatprep.subr.mxu0 0.0
    %925 = vmatpush1.msra.mxu0 0.0
    %926 = vmatprep.subr.mxu0 0.0
    %927 = vmatpush1.msra.mxu0 0.0
    %928 = vmatprep.subr.mxu0 0.0
    %929 = vmatpush1.msra.mxu0 0.0
    %930 = vmatprep.subr.mxu0 0.0
    %931 = vmatpush1.msra.mxu0 0.0
    %932 = vmatprep.subr.mxu0 0.0
    %933 = vmatpush1.msra.mxu0 0.0
    %934 = vmatprep.subr.mxu0 0.0
    %935 = vmatpush1.msra.mxu0 0.0
    %936 = vmatprep.subr.mxu0 0.0
    %937 = vmatpush1.msra.mxu0 0.0
    %938 = vmatprep.subr.mxu0 0.0
    %939 = vmatpush1.msra.mxu0 0.0
    %940 = vmatprep.subr.mxu0 0.0
    %941 = vmatpush1.msra.mxu0 0.0
    %942 = vmatprep.subr.mxu0 0.0
    %943 = vmatpush1.msra.mxu0 0.0
    %944 = vmatprep.subr.mxu0 0.0
    %945 = vmatpush1.msra.mxu0 0.0
    %946 = vmatprep.subr.mxu0 0.0
    %947 = vmatpush1.msra.mxu0 0.0
    %948 = vmatprep.subr.mxu0 0.0
    %949 = vmatpush1.msra.mxu0 0.0
    %950 = vmatprep.subr.mxu0 0.0
    %951 = vmatpush1.msra.mxu0 0.0
    %952 = vmatprep.subr.mxu0 0.0
    %953 = vmatpush1.msra.mxu0 0.0
    %954 = vmatprep.subr.mxu0 0.0
    %955 = vmatpush1.msra.mxu0 0.0
    %956 = vmatprep.subr.mxu0 0.0
    %957 = vmatpush1.msra.mxu0 0.0
    %958 = vmatprep.mubr.f32.mxu0 0.0
    %959 = vmatmul.mubr.f32.gmra.mrb[0].mxu0 %v892
    %v960 = vpop.f32.mrb[0].mxu0
    %v961 = vadd.f32 0.0, %v960
    %v962 = vpop.f32.mrb[0].mxu0
    %963 = vdwg.mxu0
    %v965 = vrot.slane %v961, 4
    %v967 = vadd.f32 %v252, %v965
    %v968 = vxor.u32 %v967, 2147483648
    %v969 = vmul.f32 %v968, 1.442695
    %v970 = vpow.pop %v969
    %v971 = vadd.f32 %v970, 1.0
    %v972 = vrcp.pop %v971
    %v973 = vmul.f32 1.0, %v972
    %v974 = vtanh.pop %v967
    %v976 = vrot.slane %v881, 6
    %v978 = vmul.f32 %v973, %v976
    %980 = vrot.lane.b32.xlu0 %v974, 64
    %v981 = vpop.permute.xlu0 %980
    %v983 = vmul.f32 %v973, %v981
    %985 = vrot.lane.b32.xlu0 %v983, 32
    %v986 = vpop.permute.xlu0 %985
    %v988 = vadd.f32 %v978, %v986
    %v989 = vtanh.pop %v988
    %991 = vrot.lane.b32.xlu0 %v989, 64
    %v992 = vpop.permute.xlu0 %991
    %v994 = vmul.f32 %v973, %v992
    %v996 = vrot.slane %v994, 4
    %997 = vrot.lane.b32.xlu0 %v996, 32
    %v998 = vpop.permute.xlu0 %997
    %v999 = vsel %vm173, %v998, 0
    %1001 = vmatprep.subr.mxu0 0.0
    %1002 = vmatpush1.msra.mxu0 %v256
    %1003 = vmatprep.subr.mxu0 0.0
    %1004 = vmatpush1.msra.mxu0 %v257
    %1005 = vmatprep.subr.mxu0 0.0
    %1006 = vmatpush1.msra.mxu0 %v258
    %1007 = vmatprep.subr.mxu0 0.0
    %1008 = vmatpush1.msra.mxu0 %v259
    %1009 = vmatprep.subr.mxu0 0.0
    %1010 = vmatpush1.msra.mxu0 0.0
    %1011 = vmatprep.subr.mxu0 0.0
    %1012 = vmatpush1.msra.mxu0 0.0
    %1013 = vmatprep.subr.mxu0 0.0
    %1014 = vmatpush1.msra.mxu0 0.0
    %1015 = vmatprep.subr.mxu0 0.0
    %1016 = vmatpush1.msra.mxu0 0.0
    %1017 = vmatprep.subr.mxu0 0.0
    %1018 = vmatpush1.msra.mxu0 0.0
    %1019 = vmatprep.subr.mxu0 0.0
    %1020 = vmatpush1.msra.mxu0 0.0
    %1021 = vmatprep.subr.mxu0 0.0
    %1022 = vmatpush1.msra.mxu0 0.0
    %1023 = vmatprep.subr.mxu0 0.0
    %1024 = vmatpush1.msra.mxu0 0.0
    %1025 = vmatprep.subr.mxu0 0.0
    %1026 = vmatpush1.msra.mxu0 0.0
    %1027 = vmatprep.subr.mxu0 0.0
    %1028 = vmatpush1.msra.mxu0 0.0
    %1029 = vmatprep.subr.mxu0 0.0
    %1030 = vmatpush1.msra.mxu0 0.0
    %1031 = vmatprep.subr.mxu0 0.0
    %1032 = vmatpush1.msra.mxu0 0.0
    %1033 = vmatprep.subr.mxu0 0.0
    %1034 = vmatpush1.msra.mxu0 0.0
    %1035 = vmatprep.subr.mxu0 0.0
    %1036 = vmatpush1.msra.mxu0 0.0
    %1037 = vmatprep.subr.mxu0 0.0
    %1038 = vmatpush1.msra.mxu0 0.0
    %1039 = vmatprep.subr.mxu0 0.0
    %1040 = vmatpush1.msra.mxu0 0.0
    %1041 = vmatprep.subr.mxu0 0.0
    %1042 = vmatpush1.msra.mxu0 0.0
    %1043 = vmatprep.subr.mxu0 0.0
    %1044 = vmatpush1.msra.mxu0 0.0
    %1045 = vmatprep.subr.mxu0 0.0
    %1046 = vmatpush1.msra.mxu0 0.0
    %1047 = vmatprep.subr.mxu0 0.0
    %1048 = vmatpush1.msra.mxu0 0.0
    %1049 = vmatprep.subr.mxu0 0.0
    %1050 = vmatpush1.msra.mxu0 0.0
    %1051 = vmatprep.subr.mxu0 0.0
    %1052 = vmatpush1.msra.mxu0 0.0
    %1053 = vmatprep.subr.mxu0 0.0
    %1054 = vmatpush1.msra.mxu0 0.0
    %1055 = vmatprep.subr.mxu0 0.0
    %1056 = vmatpush1.msra.mxu0 0.0
    %1057 = vmatprep.subr.mxu0 0.0
    %1058 = vmatpush1.msra.mxu0 0.0
    %1059 = vmatprep.subr.mxu0 0.0
    %1060 = vmatpush1.msra.mxu0 0.0
    %1061 = vmatprep.subr.mxu0 0.0
    %1062 = vmatpush1.msra.mxu0 0.0
    %1063 = vmatprep.subr.mxu0 0.0
    %1064 = vmatpush1.msra.mxu0 0.0
    %1065 = vmatprep.mubr.f32.mxu0 0.0
    %1066 = vmatmul.mubr.f32.gmra.mrb[0].mxu0 %v999
    %v1067 = vpop.f32.mrb[0].mxu0
    %v1068 = vadd.f32 0.0, %v1067
    %v1069 = vpop.f32.mrb[0].mxu0
    %1070 = vdwg.mxu0
    %v1072 = vrot.slane %v1068, 2
    %v1074 = vadd.f32 %v252, %v1072
    %v1075 = vxor.u32 %v1074, 2147483648
    %v1076 = vmul.f32 %v1075, 1.442695
    %v1077 = vpow.pop %v1076
    %v1078 = vadd.f32 %v1077, 1.0
    %v1079 = vrcp.pop %v1078
    %v1080 = vmul.f32 1.0, %v1079
    %v1081 = vtanh.pop %v1074
    %v1083 = vrot.slane %v988, 6
    %v1085 = vmul.f32 %v1080, %v1083
    %1087 = vrot.lane.b32.xlu0 %v1081, 64
    %v1088 = vpop.permute.xlu0 %1087
    %v1090 = vmul.f32 %v1080, %v1088
    %1092 = vrot.lane.b32.xlu0 %v1090, 32
    %v1093 = vpop.permute.xlu0 %1092
    %v1095 = vadd.f32 %v1085, %v1093
    %v1096 = vtanh.pop %v1095
    %1098 = vrot.lane.b32.xlu0 %v1096, 64
    %v1099 = vpop.permute.xlu0 %1098
    %v1101 = vmul.f32 %v1080, %v1099
    %v1102 = vxor.u32 %v254, 2147483648
    %v1103 = vmul.f32 %v1102, 1.442695
    %v1104 = vpow.pop %v1103
    %v1105 = vadd.f32 %v1104, 1.0
    %v1106 = vrcp.pop %v1105
    %v1107 = vmul.f32 1.0, %v1106
    %v1108 = vtanh.pop %v254
    %1110 = vrot.lane.b32.xlu0 %v1108, 64
    %v1111 = vpop.permute.xlu0 %1110
    %v1113 = vmul.f32 %v1107, %v1111
    %v1114 = vtanh.pop %v1113
    %1116 = vrot.lane.b32.xlu0 %v1114, 96
    %v1117 = vpop.permute.xlu0 %1116
    %v1119 = vmul.f32 %v1107, %v1117
    %1121 = vrot.lane.b32.xlu0 %v1101, 32
    %v1122 = vpop.permute.xlu0 %1121
    %1125 = vrot.lane.b32.xlu0 %v1119, 64
    %v1126 = vpop.permute.xlu0 %1125
    %v1128 = vsel %vm173, %v1122, %v1126
    %v1129 = vld [vmem:[%s6] sm:$0xff]
    %v1130 = vld [vmem:[%s6 + $0x8] sm:$0xff]
    %v1131 = vld [vmem:[%s6 + $0x10] sm:$0xff]
    %v1132 = vld [vmem:[%s6 + $0x18] sm:$0xff]
    %v1133 = vld [vmem:[%s6 + $0x20] sm:$0xff]
    %v1134 = vld [vmem:[%s6 + $0x28] sm:$0xff]
    %v1135 = vld [vmem:[%s6 + $0x30] sm:$0xff]
    %v1136 = vld [vmem:[%s6 + $0x38] sm:$0xff]
    %v1137 = vld [vmem:[%s7] sm:$0x1]
    %v1139 = vlaneseq
    %v1140 = vshrl.u32 %v1139, 7
    %v1141 = vsub.s32 0, %v1140
    %v1142 = vrot.slane %v1137, %v1141
    %v1145 = vrot.slane %v1128, 6
    %vm1146 = vcmask 523264
    %v1147 = vsel %vm1146, %v1145, 0
    %1149 = vmatprep.subr.mxu0 0.0
    %1150 = vmatpush1.msra.mxu0 %v1129
    %1151 = vmatprep.subr.mxu0 0.0
    %1152 = vmatpush1.msra.mxu0 %v1130
    %1153 = vmatprep.subr.mxu0 0.0
    %1154 = vmatpush1.msra.mxu0 %v1131
    %1155 = vmatprep.subr.mxu0 0.0
    %1156 = vmatpush1.msra.mxu0 %v1132
    %1157 = vmatprep.subr.mxu0 0.0
    %1158 = vmatpush1.msra.mxu0 %v1133
    %1159 = vmatprep.subr.mxu0 0.0
    %1160 = vmatpush1.msra.mxu0 %v1134
    %1161 = vmatprep.subr.mxu0 0.0
    %1162 = vmatpush1.msra.mxu0 %v1135
    %1163 = vmatprep.subr.mxu0 0.0
    %1164 = vmatpush1.msra.mxu0 %v1136
    %1165 = vmatprep.subr.mxu0 0.0
    %1166 = vmatpush1.msra.mxu0 0.0
    %1167 = vmatprep.subr.mxu0 0.0
    %1168 = vmatpush1.msra.mxu0 0.0
    %1169 = vmatprep.subr.mxu0 0.0
    %1170 = vmatpush1.msra.mxu0 0.0
    %1171 = vmatprep.subr.mxu0 0.0
    %1172 = vmatpush1.msra.mxu0 0.0
    %1173 = vmatprep.subr.mxu0 0.0
    %1174 = vmatpush1.msra.mxu0 0.0
    %1175 = vmatprep.subr.mxu0 0.0
    %1176 = vmatpush1.msra.mxu0 0.0
    %1177 = vmatprep.subr.mxu0 0.0
    %1178 = vmatpush1.msra.mxu0 0.0
    %1179 = vmatprep.subr.mxu0 0.0
    %1180 = vmatpush1.msra.mxu0 0.0
    %1181 = vmatprep.subr.mxu0 0.0
    %1182 = vmatpush1.msra.mxu0 0.0
    %1183 = vmatprep.subr.mxu0 0.0
    %1184 = vmatpush1.msra.mxu0 0.0
    %1185 = vmatprep.subr.mxu0 0.0
    %1186 = vmatpush1.msra.mxu0 0.0
    %1187 = vmatprep.subr.mxu0 0.0
    %1188 = vmatpush1.msra.mxu0 0.0
    %1189 = vmatprep.subr.mxu0 0.0
    %1190 = vmatpush1.msra.mxu0 0.0
    %1191 = vmatprep.subr.mxu0 0.0
    %1192 = vmatpush1.msra.mxu0 0.0
    %1193 = vmatprep.subr.mxu0 0.0
    %1194 = vmatpush1.msra.mxu0 0.0
    %1195 = vmatprep.subr.mxu0 0.0
    %1196 = vmatpush1.msra.mxu0 0.0
    %1197 = vmatprep.subr.mxu0 0.0
    %1198 = vmatpush1.msra.mxu0 0.0
    %1199 = vmatprep.subr.mxu0 0.0
    %1200 = vmatpush1.msra.mxu0 0.0
    %1201 = vmatprep.subr.mxu0 0.0
    %1202 = vmatpush1.msra.mxu0 0.0
    %1203 = vmatprep.subr.mxu0 0.0
    %1204 = vmatpush1.msra.mxu0 0.0
    %1205 = vmatprep.subr.mxu0 0.0
    %1206 = vmatpush1.msra.mxu0 0.0
    %1207 = vmatprep.subr.mxu0 0.0
    %1208 = vmatpush1.msra.mxu0 0.0
    %1209 = vmatprep.subr.mxu0 0.0
    %1210 = vmatpush1.msra.mxu0 0.0
    %1211 = vmatprep.subr.mxu0 0.0
    %1212 = vmatpush1.msra.mxu0 0.0
    %1213 = vmatprep.mubr.f32.mxu0 0.0
    %1214 = vmatmul.mubr.f32.gmra.mrb[0].mxu0 %v1147
    %v1215 = vpop.f32.mrb[0].mxu0
    %v1216 = vadd.f32 %v1142, %v1215
    %v1217 = vpop.f32.mrb[0].mxu0
    %1218 = vdwg.mxu0
    %vm1219 = vcmask 25600
    %1220 = vst.msk [vmem:[#allocation2] sm:$0x3] %vm1219, %v1216
    // Predicated region
    $region34: #{bilstm_head.1} parent=1 // pred_check
      _
    $region35: #{bilstm_head.1} parent=1 // pred_check_branch
      %1222 = sbr.rel (0) target = $region37
    $region36: #{bilstm_head.1} parent=1 // pred_region
      %s1224 = ssub.s32 32, 32
      %1225 = vsyncadd [#allocation3], %s1224
      %s1227 = sshll.u32 [#allocation2], 4
      %s1228 = int_to_ptr.vmem [resolvable:$true] %s1227
      %1230 = dma.vmem_to_hbm [thread:$0]  %s1228, 32, %s8, [#allocation3]
    $region37: #{bilstm_head.1} parent=1 // pred_fallthru
      _
    // Predicated region
    $region38: #{bilstm_head.1} parent=1 // pred_check
      _
    $region39: #{bilstm_head.1} parent=1 // pred_check_branch
      %1232 = sbr.rel (0) target = $region41
    $region40: #{bilstm_head.1} parent=1 // pred_region
      %1233 = dma.done [#allocation3], 32
    $region41: #{bilstm_head.1} parent=1 // pred_fallthru
      _
    %1234 = vsyncpa [#allocation3], 1

</llo_original>
